<compile_context>
chip_gen: v5e
topology: v5e:2x2
jax: 0.10.0
libtpu: 0.0.40
codegen_flags: <defaults>
</compile_context>

<pallas_src>
import math
from functools import partial

import jax
import jax.numpy as jnp
from jax import lax
from jax.experimental import pallas as pl
from jax.experimental.pallas import tpu as pltpu

BALANCE_COEFF = 0.514
DELTA_COEFF = 0.311
TOTVAR_COEFF = 0.785
MLP_HIDDEN = 256
MP_CHANNELS = 512
MP_LAYERS = 2
EPS = 1e-3        # GTVConv epsilon
TILE = 128        # node row/col tile
C_CHUNK = 128     # channel chunk for tiled pairwise L1
K_PAD = 128       # lane-dense padding of the selection output


def _round_up(x, m):
    return ((x + m - 1) // m) * m


# --------------------------- linear (x @ W + b) ---------------------------
def _linear_kernel(x_ref, w_ref, b_ref, o_ref):
    o_ref[...] = (jnp.dot(x_ref[...], w_ref[...],
                          preferred_element_type=jnp.float32) + b_ref[...])


def linear(x, w, b, tm=TILE):
    n, f = x.shape
    c = w.shape[1]
    return pl.pallas_call(
        _linear_kernel,
        out_shape=jax.ShapeDtypeStruct((n, c), jnp.float32),
        grid_spec=pltpu.PrefetchScalarGridSpec(
            num_scalar_prefetch=0,
            grid=(n // tm,),
            in_specs=[pl.BlockSpec((tm, f), lambda i: (i, 0)),
                      pl.BlockSpec((f, c), lambda i: (0, 0)),
                      pl.BlockSpec((1, c), lambda i: (0, 0))],
            out_specs=pl.BlockSpec((tm, c), lambda i: (i, 0))),
        compiler_params=pltpu.CompilerParams(
            dimension_semantics=("parallel",)),
    )(x, w, b)


# -------------------- GTVConv propagation (tiled pairwise L1) --------------------
def _gtv_prop_kernel(xt_i_ref, xt_j_ref, a_ref, o_ref, deg_ref, acc_ref,
                     *, delta_coeff, c_chunk):
    j = pl.program_id(1)

    @pl.when(j == 0)
    def _():
        deg_ref[...] = jnp.zeros_like(deg_ref)
        acc_ref[...] = jnp.zeros_like(acc_ref)

    tm = xt_i_ref.shape[0]
    tn = xt_j_ref.shape[0]
    c = xt_i_ref.shape[1]
    n_chunks = c // c_chunk

    # diff[i, j] = sum_f |xt_i[f] - xt_j[f]|, accumulated per channel chunk so
    # the live intermediate is only (tm, tn, c_chunk) instead of (N, N, C).
    def chunk_body(ci, diff):
        off = pl.multiple_of(ci * c_chunk, c_chunk)
        a_blk = xt_i_ref[:, pl.ds(off, c_chunk)]          # [tm, cc]
        b_blk = xt_j_ref[:, pl.ds(off, c_chunk)]          # [tn, cc]
        return diff + jnp.sum(jnp.abs(a_blk[:, None, :] - b_blk[None, :, :]),
                              axis=-1)

    diff = lax.fori_loop(0, n_chunks, chunk_body,
                         jnp.zeros((tm, tn), jnp.float32), unroll=True)

    # Gamma = A / max(diff, eps) (zero wherever A is zero).
    gamma = a_ref[...] / jnp.maximum(diff, EPS)           # [tm, tn]
    deg_ref[...] += jnp.sum(gamma, axis=-1, keepdims=True)
    acc_ref[...] += jnp.dot(gamma, xt_j_ref[...],
                            preferred_element_type=jnp.float32)

    @pl.when(j == pl.num_programs(1) - 1)
    def _():
        xt_i = xt_i_ref[...]
        # out = (I - delta * L_gamma) xt ;  L = D_gamma - Gamma
        out = xt_i - delta_coeff * (deg_ref[...] * xt_i - acc_ref[...])
        # ELU (alpha=1); exp only sees the clamped negative branch (no inf).
        o_ref[...] = jnp.where(out > 0.0, out,
                               jnp.exp(jnp.minimum(out, 0.0)) - 1.0)


def gtv_prop(xt, adj, tm=TILE, tn=TILE, delta_coeff=DELTA_COEFF):
    n, c = xt.shape
    return pl.pallas_call(
        partial(_gtv_prop_kernel, delta_coeff=delta_coeff, c_chunk=C_CHUNK),
        out_shape=jax.ShapeDtypeStruct((n, c), jnp.float32),
        grid_spec=pltpu.PrefetchScalarGridSpec(
            num_scalar_prefetch=0,
            grid=(n // tm, n // tn),
            in_specs=[pl.BlockSpec((tm, c), lambda i, j: (i, 0)),   # row nodes
                      pl.BlockSpec((tn, c), lambda i, j: (j, 0)),   # col nodes
                      pl.BlockSpec((tm, tn), lambda i, j: (i, j))], # adj tile
            out_specs=pl.BlockSpec((tm, c), lambda i, j: (i, 0)),
            scratch_shapes=[pltpu.VMEM((tm, 1), jnp.float32),       # degree
                            pltpu.VMEM((tm, c), jnp.float32)]),     # Gamma @ xt
        compiler_params=pltpu.CompilerParams(
            dimension_semantics=("parallel", "arbitrary")),
    )(xt, xt, adj)


def gtv_conv(x, w, b, adj, tm=TILE):
    return gtv_prop(linear(x, w, b, tm=tm), adj, tm=tm, tn=tm)


# -------------------- pool: MLP selection (lane-dense K) --------------------
def _select_kernel(x_ref, w1_ref, b1_ref, w2_ref, b2_ref, s_ref):
    h = jnp.dot(x_ref[...], w1_ref[...],
                preferred_element_type=jnp.float32) + b1_ref[...]
    h = jnp.maximum(h, 0.0)
    logits = jnp.dot(h, w2_ref[...],
                     preferred_element_type=jnp.float32) + b2_ref[...]
    logits = logits - jnp.max(logits, axis=-1, keepdims=True)
    e = jnp.exp(logits)
    s_ref[...] = e / jnp.sum(e, axis=-1, keepdims=True)


def pool_select(h, w1, b1, w2, b2, tm=TILE, k_pad=K_PAD):
    n, c = h.shape
    hidden = w1.shape[1]
    k = w2.shape[1]
    # Pad K out to a full lane width; padded logits get -1e9 bias so their
    # softmax probability is exactly 0 -> s_pad[:, :k] equals the true s.
    w2p = jnp.zeros((hidden, k_pad), jnp.float32).at[:, :k].set(w2)
    b2p = jnp.full((1, k_pad), -1e9, jnp.float32).at[:, :k].set(b2)
    return pl.pallas_call(
        _select_kernel,
        out_shape=jax.ShapeDtypeStruct((n, k_pad), jnp.float32),
        grid_spec=pltpu.PrefetchScalarGridSpec(
            num_scalar_prefetch=0,
            grid=(n // tm,),
            in_specs=[pl.BlockSpec((tm, c), lambda i: (i, 0)),
                      pl.BlockSpec((c, hidden), lambda i: (0, 0)),
                      pl.BlockSpec((1, hidden), lambda i: (0, 0)),
                      pl.BlockSpec((hidden, k_pad), lambda i: (0, 0)),
                      pl.BlockSpec((1, k_pad), lambda i: (0, 0))],
            out_specs=pl.BlockSpec((tm, k_pad), lambda i: (i, 0))),
        compiler_params=pltpu.CompilerParams(
            dimension_semantics=("parallel",)),
    )(h, w1, b1, w2p, b2p)


# -------------------- pool: total-variation partial sums --------------------
def _tv_kernel(s_i_ref, s_j_ref, a_ref, part_ref):
    j = pl.program_id(1)

    @pl.when(j == 0)
    def _():
        part_ref[...] = jnp.zeros_like(part_ref)

    s_i = s_i_ref[...]                                              # [tm, Kp]
    s_j = s_j_ref[...]                                              # [tn, Kp]
    l1 = jnp.sum(jnp.abs(s_i[:, None, :] - s_j[None, :, :]), axis=-1)
    part_ref[...] += jnp.sum(a_ref[...] * l1, axis=-1, keepdims=True)


def tv_partial(s_pad, adj, tm=TILE, tn=TILE):
    n, kp = s_pad.shape
    return pl.pallas_call(
        _tv_kernel,
        out_shape=jax.ShapeDtypeStruct((n, 1), jnp.float32),
        grid_spec=pltpu.PrefetchScalarGridSpec(
            num_scalar_prefetch=0,
            grid=(n // tm, n // tn),
            in_specs=[pl.BlockSpec((tm, kp), lambda i, j: (i, 0)),
                      pl.BlockSpec((tn, kp), lambda i, j: (j, 0)),
                      pl.BlockSpec((tm, tn), lambda i, j: (i, j))],
            out_specs=pl.BlockSpec((tm, 1), lambda i, j: (i, 0))),
        compiler_params=pltpu.CompilerParams(
            dimension_semantics=("parallel", "arbitrary")),
    )(s_pad, s_pad, adj)


# ----------------------------- balance loss (plain JAX) -----------------------------
def balance_loss(s, k):
    n = s.shape[0]
    idx = int(math.floor(n / k))
    # TODO(synk): descending sort for the rho-quantile has no clean Pallas
    # equivalent and is tiny (N x K); done in plain JAX.  Verify the floor(n/k)
    # index against the TVGNN reference definition.
    s_sorted_desc = jnp.flip(jnp.sort(s, axis=0), axis=0)
    quant = s_sorted_desc[idx][None, :]                 # [1, K]
    diff = s - quant
    loss = jnp.where(diff >= 0.0, (k - 1.0) * diff, -diff)
    tot = jnp.sum(loss)
    denom = float(n * (k - 1))
    return BALANCE_COEFF * (denom - tot) / denom


# ------------------------------- full Net -------------------------------
def init_params(key, num_features, num_classes):
    def glorot(k, shape):
        limit = math.sqrt(6.0 / (shape[0] + shape[1]))
        return jax.random.uniform(k, shape, jnp.float32, -limit, limit)

    keys = jax.random.split(key, MP_LAYERS + 2)
    mp = []
    in_c = num_features
    for i in range(MP_LAYERS):
        w = glorot(keys[i], (in_c, MP_CHANNELS))
        b = jnp.zeros((1, MP_CHANNELS), jnp.float32)
        mp.append((w, b))
        in_c = MP_CHANNELS
    w1 = glorot(keys[MP_LAYERS], (MP_CHANNELS, MLP_HIDDEN))
    b1 = jnp.zeros((1, MLP_HIDDEN), jnp.float32)
    w2 = glorot(keys[MP_LAYERS + 1], (MLP_HIDDEN, num_classes))
    b2 = jnp.zeros((1, num_classes), jnp.float32)
    return {"mp": mp, "pool": (w1, b1, w2, b2)}


def net_forward(params, x, edge_index, edge_weight, num_classes):
    n = x.shape[0]
    n_pad = _round_up(n, TILE)

    # glue: dense adjacency (to_dense_adj with edge_attr; duplicates summed),
    # zero-padded rows/cols do not affect real nodes (gamma = A/... = 0 there).
    adj = jnp.zeros((n_pad, n_pad), jnp.float32).at[
        edge_index[0], edge_index[1]].add(edge_weight.astype(jnp.float32))
    x_p = jnp.zeros((n_pad, x.shape[1]), jnp.float32).at[:n].set(
        x.astype(jnp.float32))

    # Precompute 1/(2*n_edges) outside the kernel (guard against empty graph).
    n_edges = jnp.sum((adj != 0.0).astype(jnp.float32))
    inv_two_e = jnp.where(n_edges > 0.0, 1.0 / (2.0 * n_edges), 0.0)

    h = x_p
    for (w, b) in params["mp"]:
        h = gtv_conv(h, w, b, adj)

    w1, b1, w2, b2 = params["pool"]
    s_pad = pool_select(h, w1, b1, w2, b2)                 # [n_pad, K_PAD]

    tv_part = tv_partial(s_pad, adj)                       # [n_pad, 1]
    tv_loss = TOTVAR_COEFF * jnp.sum(tv_part) * inv_two_e

    s = s_pad[:n, :num_classes]
    bal_loss = balance_loss(s, num_classes)

    return s, tv_loss, bal_loss


if __name__ == "__main__":
    N, F, K, E = 256, 16, 6, 1024   # nodes, num_features, num_classes, edges

    key = jax.random.PRNGKey(0)
    k_x, k_src, k_dst, k_w, k_p = jax.random.split(key, 5)

    x = jax.random.normal(k_x, (N, F), jnp.float32)
    src = jax.random.randint(k_src, (E,), 0, N)
    dst = jax.random.randint(k_dst, (E,), 0, N)
    edge_index = jnp.stack([src, dst])                     # [2, E]
    edge_weight = jax.random.uniform(k_w, (E,), jnp.float32, 0.1, 1.0)

    params = init_params(k_p, F, K)

    s, tv_loss, bal_loss = net_forward(params, x, edge_index, edge_weight, K)
    jax.block_until_ready((s, tv_loss, bal_loss))

    assert s.shape == (N, K)
    assert s.dtype == jnp.float32
    assert tv_loss.shape == () and bal_loss.shape == ()
    assert bool(jnp.all(jnp.isfinite(s)))
    assert bool(jnp.isfinite(tv_loss)) and bool(jnp.isfinite(bal_loss))
    print("KERNEL_OK")
</pallas_src>

<mosaic_0001>
module attributes {stable_mosaic.version = 11 : i64} {
  func.func @_linear_kernel(%arg0: i32, %arg1: memref<128x16xf32, #tpu.memory_space<vmem>>, %arg2: memref<16x512xf32, #tpu.memory_space<vmem>>, %arg3: memref<1x512xf32, #tpu.memory_space<vmem>>, %arg4: memref<128x512xf32, #tpu.memory_space<vmem>>) attributes {dimension_semantics = [#tpu.dimension_semantics<parallel>], iteration_bounds = array<i64: 2>, scalar_prefetch = 0 : i64, scratch_operands = 0 : i64, tpu.core_type = #tpu.core_type<tc>, window_params = [{transform_indices = @transform_0, window_bounds = array<i64: 128, 16>}, {pipeline_mode = #tpu.pipeline_mode<synchronous>, transform_indices = @transform_1, window_bounds = array<i64: 16, 512>}, {pipeline_mode = #tpu.pipeline_mode<synchronous>, transform_indices = @transform_2, window_bounds = array<i64: 1, 512>}, {transform_indices = @transform_3, window_bounds = array<i64: 128, 512>}]} {
    %c0 = arith.constant 0 : index
    %c0_0 = arith.constant 0 : index
    %0 = vector.load %arg1[%c0, %c0_0] : memref<128x16xf32, #tpu.memory_space<vmem>>, vector<128x16xf32>
    %c0_1 = arith.constant 0 : index
    %c0_2 = arith.constant 0 : index
    %1 = vector.load %arg2[%c0_1, %c0_2] : memref<16x512xf32, #tpu.memory_space<vmem>>, vector<16x512xf32>
    %cst = arith.constant dense<0.000000e+00> : vector<128x512xf32>
    %2 = tpu.matmul %0, %1, %cst {dimension_numbers = #tpu.dot_dimension_numbers<[1], [0], [0], [1], [0, 0, 1, 1], [], []>} : vector<128x16xf32>, vector<16x512xf32>, vector<128x512xf32> -> vector<128x512xf32>
    %c0_3 = arith.constant 0 : index
    %c0_4 = arith.constant 0 : index
    %3 = vector.load %arg3[%c0_3, %c0_4] : memref<1x512xf32, #tpu.memory_space<vmem>>, vector<1x512xf32>
    %4 = vector.broadcast %3 : vector<1x512xf32> to vector<128x512xf32>
    %5 = arith.addf %2, %4 : vector<128x512xf32>
    %c0_5 = arith.constant 0 : index
    %c0_6 = arith.constant 0 : index
    %6 = vector.load %arg4[%c0_5, %c0_6] : memref<128x512xf32, #tpu.memory_space<vmem>>, vector<128x512xf32>
    tpu.vector_store %arg4[%c0_5, %c0_6], %5 {strides = array<i32>} : memref<128x512xf32, #tpu.memory_space<vmem>>, vector<128x512xf32>,
    return
  }
  func.func @transform_0(%arg0: i32) -> (i32, i32) {
    %c0_i32 = arith.constant 0 : i32
    %c0_i32_0 = arith.constant 0 : i32
    return %arg0, %c0_i32 : i32, i32
  }
  func.func @transform_1(%arg0: i32) -> (i32, i32) {
    %c0_i32 = arith.constant 0 : i32
    %c0_i32_0 = arith.constant 0 : i32
    %c0_i32_1 = arith.constant 0 : i32
    return %c0_i32, %c0_i32_0 : i32, i32
  }
  func.func @transform_2(%arg0: i32) -> (i32, i32) {
    %c0_i32 = arith.constant 0 : i32
    %c0_i32_0 = arith.constant 0 : i32
    %c0_i32_1 = arith.constant 0 : i32
    return %c0_i32, %c0_i32_0 : i32, i32
  }
  func.func @transform_3(%arg0: i32) -> (i32, i32) {
    %c0_i32 = arith.constant 0 : i32
    %c0_i32_0 = arith.constant 0 : i32
    return %arg0, %c0_i32 : i32, i32
  }
}

</mosaic_0001>

<llo_original>
// kernel: tpu_custom_call.1
$region0: #{tpu_custom_call.1}
  #allocation0 [shape = 'u32[]', space=smem, size = 0x4, offset = 0x4, fixed_abs, tag = 'smem constant byte address 0x4 - core index']
  #allocation1 [shape = 'u32[72,128]{1,0:T(1,128)}', space=vmem, size = 0x9000, scoped, tag = 'internal scratch']
  %s0 = inlined_call_operand.vmem [shape: f32[256,16], index: 0, kind: input, shape index: {}]
  %s1 = inlined_call_operand.vmem [shape: f32[16,512], index: 1, kind: input, shape index: {}]
  %s2 = inlined_call_operand.vmem [shape: f32[1,512], index: 2, kind: input, shape index: {}]
  %s3 = inlined_call_operand.hbm [shape: f32[256,512], index: 3, kind: output, shape index: {}]
  %s4 = sld [smem:[#allocation0]]
  $region45: #{tpu_custom_call.1} parent=0
    _
  %s6 = ssub.s32 1, %s4
  %s7 = scalar_select 0, %s6, %s4
  $region1: #{tpu_custom_call.1} parent=0
    #allocation2 [shape = 'u8[524288]{0}', space=vmem, size = 0x80000, scoped, tag = 'output window, operand 0']
    #allocation3 [shape = 's32[2]{0}', space=sflag, size = 0x8, scoped, tag = 'scoped memory for tpu_custom_call.1']
    %8 = vsyncpa [#allocation3], 0
    %s9 = scalar_lea.sflag [#allocation3], 1
    %10 = vsyncpa %s9, 0
    loop: start=0, step=1, limit=4
    $region2: #{tpu_custom_call.1} parent=1 // loop_pre_header
      _
    $region3: #{tpu_custom_call.1} parent=1 // loop_header
      %s12 = sphi 0, %s16
      %p13 = scmp.ge.s32.totalorder %s12, 4
      %s22 = sphi 0, %s24
      %s25 = sphi 0, %s22
      %s26 = sphi 0, %s25
      %s42 = sphi 0, %s26
      %s46 = sphi 0, %s46
      %s48 = sphi 0, %s46
      %s49 = sphi 0, %s48
      %s63 = sphi 0, %s49
      %s67 = sphi 0, %s67
      %s69 = sphi 0, %s67
      %s70 = sphi 0, %s69
      %s84 = sphi 0, %s70
      %s90 = sphi 0, %s92
      %s93 = sphi 0, %s90
      %s94 = sphi 0, %s93
      %s110 = sphi 0, %s94
    $region4: #{tpu_custom_call.1} parent=1 // loop_header_branch
      %15 = sbr.rel (%p13) target = $region8
    $region5: #{tpu_custom_call.1} parent=1 // loop_body
      %s17 = ssub.s32 %s12, 1
      %s18 = ssub.s32 %s12, 2
      %s19 = sadd.s32 %s12, 1
      %s20 = ssub.s32 %s12, %s19
      %p21 = scmp.eq.s32.totalorder %s20, 0
      %s23 = sadd.s32 %s22, 1
      %s24 = scalar_select %p21, %s22, %s23
      %p27 = pneg %p21
      %p28 = scmp.eq.s32.totalorder %s12, 1
      %p29 = por %p27, %p28
      %p30 = scmp.ne.s32.totalorder %s22, %s25
      %p31 = scmp.eq.s32.totalorder %s12, 0
      %p32 = por %p30, %p31
      %p33 = scmp.ne.s32.totalorder %s22, %s25
      %p34 = scmp.eq.s32.totalorder %s17, 1
      %p35 = por %p33, %p34
      %p36 = scmp.ne.s32.totalorder %s25, %s26
      %p37 = scmp.eq.s32.totalorder %s17, 0
      %p38 = por %p36, %p37
      %p39 = scmp.ne.s32.totalorder %s25, %s26
      %p40 = scmp.eq.s32.totalorder %s18, 1
      %p41 = por %p39, %p40
      %p43 = scmp.ne.s32.totalorder %s26, %s42
      %p44 = scmp.eq.s32.totalorder %s18, 0
      %p45 = por %p43, %p44
      %s47 = sadd.s32 %s46, 1
      %p50 = scmp.eq.s32.totalorder %s12, 1
      %p51 = scmp.ne.s32.totalorder %s46, %s48
      %p52 = scmp.eq.s32.totalorder %s12, 0
      %p53 = por %p51, %p52
      %p54 = scmp.ne.s32.totalorder %s46, %s48
      %p55 = scmp.eq.s32.totalorder %s17, 1
      %p56 = por %p54, %p55
      %p57 = scmp.ne.s32.totalorder %s48, %s49
      %p58 = scmp.eq.s32.totalorder %s17, 0
      %p59 = por %p57, %p58
      %p60 = scmp.ne.s32.totalorder %s48, %s49
      %p61 = scmp.eq.s32.totalorder %s18, 1
      %p62 = por %p60, %p61
      %p64 = scmp.ne.s32.totalorder %s49, %s63
      %p65 = scmp.eq.s32.totalorder %s18, 0
      %p66 = por %p64, %p65
      %s68 = sadd.s32 %s67, 1
      %p71 = scmp.eq.s32.totalorder %s12, 1
      %p72 = scmp.ne.s32.totalorder %s67, %s69
      %p73 = scmp.eq.s32.totalorder %s12, 0
      %p74 = por %p72, %p73
      %p75 = scmp.ne.s32.totalorder %s67, %s69
      %p76 = scmp.eq.s32.totalorder %s17, 1
      %p77 = por %p75, %p76
      %p78 = scmp.ne.s32.totalorder %s69, %s70
      %p79 = scmp.eq.s32.totalorder %s17, 0
      %p80 = por %p78, %p79
      %p81 = scmp.ne.s32.totalorder %s69, %s70
      %p82 = scmp.eq.s32.totalorder %s18, 1
      %p83 = por %p81, %p82
      %p85 = scmp.ne.s32.totalorder %s70, %s84
      %p86 = scmp.eq.s32.totalorder %s18, 0
      %p87 = por %p85, %p86
      %s88 = ssub.s32 %s12, %s19
      %p89 = scmp.eq.s32.totalorder %s88, 0
      %s91 = sadd.s32 %s90, 1
      %s92 = scalar_select %p89, %s90, %s91
      %p95 = pneg %p89
      %p96 = scmp.eq.s32.totalorder %s12, 1
      %p97 = por %p95, %p96
      %p98 = scmp.ne.s32.totalorder %s90, %s93
      %p99 = scmp.eq.s32.totalorder %s12, 0
      %p100 = por %p98, %p99
      %p101 = scmp.ne.s32.totalorder %s90, %s93
      %p102 = scmp.eq.s32.totalorder %s17, 1
      %p103 = por %p101, %p102
      %p104 = scmp.ne.s32.totalorder %s93, %s94
      %p105 = scmp.eq.s32.totalorder %s17, 0
      %p106 = por %p104, %p105
      %p107 = scmp.ne.s32.totalorder %s93, %s94
      %p108 = scmp.eq.s32.totalorder %s18, 1
      %p109 = por %p107, %p108
      %p111 = scmp.ne.s32.totalorder %s94, %s110
      %p112 = scmp.eq.s32.totalorder %s18, 0
      %p113 = por %p111, %p112
      %p114 = scmp.le.s32.totalorder 1, %s12
      %p115 = scmp.lt.s32.totalorder %s12, 3
      %p116 = pnand %p114, %p115
      %p117 = pneg %p116
      // Predicated region
      $region9: #{tpu_custom_call.1} parent=5 // pred_check
        _
      $region10: #{tpu_custom_call.1} parent=5 // pred_check_branch
        %119 = sbr.rel (%p116) target = $region12
      $region11: #{tpu_custom_call.1} parent=5 // pred_region
        %s120 = ssub.s32 %s12, 1
        // Predicated region
        $region13: #{tpu_custom_call.1} parent=11 // pred_check
          %p121 = pneg %p59
        $region14: #{tpu_custom_call.1} parent=11 // pred_check_branch
          %123 = sbr.rel (%p121) target = $region16
        $region15: #{tpu_custom_call.1} parent=11 // pred_region
          _
        $region16: #{tpu_custom_call.1} parent=11 // pred_fallthru
          _
        // Predicated region
        $region17: #{tpu_custom_call.1} parent=11 // pred_check
          %p124 = pneg %p80
        $region18: #{tpu_custom_call.1} parent=11 // pred_check_branch
          %126 = sbr.rel (%p124) target = $region20
        $region19: #{tpu_custom_call.1} parent=11 // pred_region
          _
        $region20: #{tpu_custom_call.1} parent=11 // pred_fallthru
          _
      $region12: #{tpu_custom_call.1} parent=5 // pred_fallthru
        _
      %p127 = scmp.lt.s32.totalorder %s12, 2
      // Predicated region
      $region21: #{tpu_custom_call.1} parent=5 // pred_check
        %p128 = pneg %p127
      $region22: #{tpu_custom_call.1} parent=5 // pred_check_branch
        %130 = sbr.rel (%p128) target = $region24
      $region23: #{tpu_custom_call.1} parent=5 // pred_region
        // Predicated region
        $region25: #{tpu_custom_call.1} parent=23 // pred_check
          %p131 = pneg %p32
        $region26: #{tpu_custom_call.1} parent=23 // pred_check_branch
          %133 = sbr.rel (%p131) target = $region28
        $region27: #{tpu_custom_call.1} parent=23 // pred_region
          %s134 = smul.u32 16, %s12
          %p135 = scmp.lt.s32.totalorder %s134, 31
          %s136 = scalar_select %p135, %s134, 31
          %s137 = smul.addr %s136, 8
          %s138 = scalar_lea.vmem %s0, %s137
          %s139 = smul.u32 16, %s12
        $region28: #{tpu_custom_call.1} parent=23 // pred_fallthru
          _
      $region24: #{tpu_custom_call.1} parent=5 // pred_fallthru
        _
      %p140 = scmp.le.s32.totalorder 1, %s12
      %p141 = scmp.lt.s32.totalorder %s12, 3
      %p142 = pnand %p140, %p141
      %p143 = pneg %p142
      // Predicated region
      $region29: #{tpu_custom_call.1} parent=5 // pred_check
        _
      $region30: #{tpu_custom_call.1} parent=5 // pred_check_branch
        %145 = sbr.rel (%p142) target = $region32
      $region31: #{tpu_custom_call.1} parent=5 // pred_region
        %s146 = ssub.s32 %s12, 1
        %s147 = smul.u32 16, %s17
        %p148 = scmp.lt.s32.totalorder %s147, 31
        %s149 = scalar_select %p148, %s147, 31
        %s150 = smul.addr %s149, 8
        %s151 = scalar_lea.vmem %s0, %s150
        %p152 = pneg %p38
        %p153 = pneg %p35
        %p154 = pneg %p59
        %p155 = pneg %p56
        %p156 = pneg %p80
        %p157 = pneg %p77
        %p158 = pneg %p106
        %p159 = pneg %p103
        %s160 = sand.u32 %s93, 1
        %s161 = scalar_lea.sflag [#allocation3], %s160
        %s162 = sand.u32 %s93, 1
        %s163 = smul.addr %s162, 512
        %s164 = scalar_lea.vmem [#allocation2], %s163
        %s165 = smul.u32 16, %s17
        %p166 = scmp.lt.s32.totalorder %s165, 31
        %s167 = scalar_select %p166, %s165, 31
        %s168 = smul.addr %s167, 8
        %s169 = scalar_lea.vmem %s0, %s168
        %s170 = smul.u32 16, %s17
        %s171 = smul.u32 16, %s17
        %v172 = vld [vmem:[%s169] sm:$0xff]
        %v173 = vld [vmem:[%s169 + $0x8] sm:$0xff]
        %v174 = vld [vmem:[%s169 + $0x10] sm:$0xff]
        %v175 = vld [vmem:[%s169 + $0x18] sm:$0xff]
        %v176 = vld [vmem:[%s169 + $0x20] sm:$0xff]
        %v177 = vld [vmem:[%s169 + $0x28] sm:$0xff]
        %v178 = vld [vmem:[%s169 + $0x30] sm:$0xff]
        %v179 = vld [vmem:[%s169 + $0x38] sm:$0xff]
        %v180 = vld [vmem:[%s169 + $0x40] sm:$0xff]
        %v181 = vld [vmem:[%s169 + $0x48] sm:$0xff]
        %v182 = vld [vmem:[%s169 + $0x50] sm:$0xff]
        %v183 = vld [vmem:[%s169 + $0x58] sm:$0xff]
        %v184 = vld [vmem:[%s169 + $0x60] sm:$0xff]
        %v185 = vld [vmem:[%s169 + $0x68] sm:$0xff]
        %v186 = vld [vmem:[%s169 + $0x70] sm:$0xff]
        %v187 = vld [vmem:[%s169 + $0x78] sm:$0xff]
        %v188 = vld [vmem:[%s1] sm:$0xff]
        %v189 = vld [vmem:[%s1 + $0x8] sm:$0xff]
        %v190 = vld [vmem:[%s1 + $0x10] sm:$0xff]
        %v191 = vld [vmem:[%s1 + $0x18] sm:$0xff]
        %v192 = vld [vmem:[%s1 + $0x20] sm:$0xff]
        %v193 = vld [vmem:[%s1 + $0x28] sm:$0xff]
        %v194 = vld [vmem:[%s1 + $0x30] sm:$0xff]
        %v195 = vld [vmem:[%s1 + $0x38] sm:$0xff]
        %v196 = vld [vmem:[%s2] sm:$0xf]
        %v198 = vperm.slane %v196, 0
        %v199 = vperm.slane %v196, 1
        %v200 = vperm.slane %v196, 2
        %v201 = vperm.slane %v196, 3
        %vm206 = vcmask 130048
        %v208 = vsel %vm206, %v172, 0
        %v211 = vsel %vm206, %v173, 0
        %v214 = vsel %vm206, %v174, 0
        %v217 = vsel %vm206, %v175, 0
        %v220 = vsel %vm206, %v176, 0
        %v223 = vsel %vm206, %v177, 0
        %v226 = vsel %vm206, %v178, 0
        %v229 = vsel %vm206, %v179, 0
        %v232 = vsel %vm206, %v180, 0
        %v235 = vsel %vm206, %v181, 0
        %v238 = vsel %vm206, %v182, 0
        %v241 = vsel %vm206, %v183, 0
        %v244 = vsel %vm206, %v184, 0
        %v247 = vsel %vm206, %v185, 0
        %v250 = vsel %vm206, %v186, 0
        %v253 = vsel %vm206, %v187, 0
        %255 = vmatpush.msra.mxu0 0.0
        %256 = vmatpush.msra.mxu0 0.0
        %257 = vmatpush.msra.mxu0 0.0
        %258 = vmatpush.msra.mxu0 0.0
        %259 = vmatpush.msra.mxu0 0.0
        %260 = vmatpush.msra.mxu0 0.0
        %261 = vmatpush.msra.mxu0 0.0
        %262 = vmatpush.msra.mxu0 0.0
        %263 = vmatpush.msra.mxu0 0.0
        %264 = vmatpush.msra.mxu0 0.0
        %265 = vmatpush.msra.mxu0 0.0
        %266 = vmatpush.msra.mxu0 0.0
        %267 = vmatpush.msra.mxu0 0.0
        %268 = vmatpush.msra.mxu0 0.0
        %269 = vmatpush.msra.mxu0 %v192
        %270 = vmatpush.msra.mxu0 %v188
        %271 = vmatmul.f32.gmra.mxu0 %v208
        %v272 = vpop.f32.mrf.mxu0
        %v273 = vadd.f32 %v198, %v272
        %274 = vmatmul.f32.gmra.mxu0 %v211
        %v275 = vpop.f32.mrf.mxu0
        %v276 = vadd.f32 %v198, %v275
        %277 = vmatmul.f32.gmra.mxu0 %v214
        %v278 = vpop.f32.mrf.mxu0
        %v279 = vadd.f32 %v198, %v278
        %280 = vmatmul.f32.gmra.mxu0 %v217
        %v281 = vpop.f32.mrf.mxu0
        %v282 = vadd.f32 %v198, %v281
        %283 = vmatmul.f32.gmra.mxu0 %v220
        %v284 = vpop.f32.mrf.mxu0
        %v285 = vadd.f32 %v198, %v284
        %286 = vmatmul.f32.gmra.mxu0 %v223
        %v287 = vpop.f32.mrf.mxu0
        %v288 = vadd.f32 %v198, %v287
        %289 = vmatmul.f32.gmra.mxu0 %v226
        %v290 = vpop.f32.mrf.mxu0
        %v291 = vadd.f32 %v198, %v290
        %292 = vmatmul.f32.gmra.mxu0 %v229
        %v293 = vpop.f32.mrf.mxu0
        %v294 = vadd.f32 %v198, %v293
        %295 = vmatmul.f32.gmra.mxu0 %v232
        %v296 = vpop.f32.mrf.mxu0
        %v297 = vadd.f32 %v198, %v296
        %298 = vmatmul.f32.gmra.mxu0 %v235
        %v299 = vpop.f32.mrf.mxu0
        %v300 = vadd.f32 %v198, %v299
        %301 = vmatmul.f32.gmra.mxu0 %v238
        %v302 = vpop.f32.mrf.mxu0
        %v303 = vadd.f32 %v198, %v302
        %304 = vmatmul.f32.gmra.mxu0 %v241
        %v305 = vpop.f32.mrf.mxu0
        %v306 = vadd.f32 %v198, %v305
        %307 = vmatmul.f32.gmra.mxu0 %v244
        %v308 = vpop.f32.mrf.mxu0
        %v309 = vadd.f32 %v198, %v308
        %310 = vmatmul.f32.gmra.mxu0 %v247
        %v311 = vpop.f32.mrf.mxu0
        %v312 = vadd.f32 %v198, %v311
        %313 = vmatmul.f32.gmra.mxu0 %v250
        %v314 = vpop.f32.mrf.mxu0
        %v315 = vadd.f32 %v198, %v314
        %316 = vmatmul.f32.gmra.mxu0 %v253
        %v317 = vpop.f32.mrf.mxu0
        %v318 = vadd.f32 %v198, %v317
        %319 = vdwg.mxu0
        %320 = vmatpush.msra.mxu0 0.0
        %321 = vmatpush.msra.mxu0 0.0
        %322 = vmatpush.msra.mxu0 0.0
        %323 = vmatpush.msra.mxu0 0.0
        %324 = vmatpush.msra.mxu0 0.0
        %325 = vmatpush.msra.mxu0 0.0
        %326 = vmatpush.msra.mxu0 0.0
        %327 = vmatpush.msra.mxu0 0.0
        %328 = vmatpush.msra.mxu0 0.0
        %329 = vmatpush.msra.mxu0 0.0
        %330 = vmatpush.msra.mxu0 0.0
        %331 = vmatpush.msra.mxu0 0.0
        %332 = vmatpush.msra.mxu0 0.0
        %333 = vmatpush.msra.mxu0 0.0
        %334 = vmatpush.msra.mxu0 %v193
        %335 = vmatpush.msra.mxu0 %v189
        %336 = vmatmul.f32.gmra.mxu0 %v208
        %v337 = vpop.f32.mrf.mxu0
        %v338 = vadd.f32 %v199, %v337
        %339 = vmatmul.f32.gmra.mxu0 %v211
        %v340 = vpop.f32.mrf.mxu0
        %v341 = vadd.f32 %v199, %v340
        %342 = vmatmul.f32.gmra.mxu0 %v214
        %v343 = vpop.f32.mrf.mxu0
        %v344 = vadd.f32 %v199, %v343
        %345 = vmatmul.f32.gmra.mxu0 %v217
        %v346 = vpop.f32.mrf.mxu0
        %v347 = vadd.f32 %v199, %v346
        %348 = vmatmul.f32.gmra.mxu0 %v220
        %v349 = vpop.f32.mrf.mxu0
        %v350 = vadd.f32 %v199, %v349
        %351 = vmatmul.f32.gmra.mxu0 %v223
        %v352 = vpop.f32.mrf.mxu0
        %v353 = vadd.f32 %v199, %v352
        %354 = vmatmul.f32.gmra.mxu0 %v226
        %v355 = vpop.f32.mrf.mxu0
        %v356 = vadd.f32 %v199, %v355
        %357 = vmatmul.f32.gmra.mxu0 %v229
        %v358 = vpop.f32.mrf.mxu0
        %v359 = vadd.f32 %v199, %v358
        %360 = vmatmul.f32.gmra.mxu0 %v232
        %v361 = vpop.f32.mrf.mxu0
        %v362 = vadd.f32 %v199, %v361
        %363 = vmatmul.f32.gmra.mxu0 %v235
        %v364 = vpop.f32.mrf.mxu0
        %v365 = vadd.f32 %v199, %v364
        %366 = vmatmul.f32.gmra.mxu0 %v238
        %v367 = vpop.f32.mrf.mxu0
        %v368 = vadd.f32 %v199, %v367
        %369 = vmatmul.f32.gmra.mxu0 %v241
        %v370 = vpop.f32.mrf.mxu0
        %v371 = vadd.f32 %v199, %v370
        %372 = vmatmul.f32.gmra.mxu0 %v244
        %v373 = vpop.f32.mrf.mxu0
        %v374 = vadd.f32 %v199, %v373
        %375 = vmatmul.f32.gmra.mxu0 %v247
        %v376 = vpop.f32.mrf.mxu0
        %v377 = vadd.f32 %v199, %v376
        %378 = vmatmul.f32.gmra.mxu0 %v250
        %v379 = vpop.f32.mrf.mxu0
        %v380 = vadd.f32 %v199, %v379
        %381 = vmatmul.f32.gmra.mxu0 %v253
        %v382 = vpop.f32.mrf.mxu0
        %v383 = vadd.f32 %v199, %v382
        %384 = vdwg.mxu0
        %385 = vmatpush.msra.mxu0 0.0
        %386 = vmatpush.msra.mxu0 0.0
        %387 = vmatpush.msra.mxu0 0.0
        %388 = vmatpush.msra.mxu0 0.0
        %389 = vmatpush.msra.mxu0 0.0
        %390 = vmatpush.msra.mxu0 0.0
        %391 = vmatpush.msra.mxu0 0.0
        %392 = vmatpush.msra.mxu0 0.0
        %393 = vmatpush.msra.mxu0 0.0
        %394 = vmatpush.msra.mxu0 0.0
        %395 = vmatpush.msra.mxu0 0.0
        %396 = vmatpush.msra.mxu0 0.0
        %397 = vmatpush.msra.mxu0 0.0
        %398 = vmatpush.msra.mxu0 0.0
        %399 = vmatpush.msra.mxu0 %v194
        %400 = vmatpush.msra.mxu0 %v190
        %401 = vmatmul.f32.gmra.mxu0 %v208
        %v402 = vpop.f32.mrf.mxu0
        %v403 = vadd.f32 %v200, %v402
        %404 = vmatmul.f32.gmra.mxu0 %v211
        %v405 = vpop.f32.mrf.mxu0
        %v406 = vadd.f32 %v200, %v405
        %407 = vmatmul.f32.gmra.mxu0 %v214
        %v408 = vpop.f32.mrf.mxu0
        %v409 = vadd.f32 %v200, %v408
        %410 = vmatmul.f32.gmra.mxu0 %v217
        %v411 = vpop.f32.mrf.mxu0
        %v412 = vadd.f32 %v200, %v411
        %413 = vmatmul.f32.gmra.mxu0 %v220
        %v414 = vpop.f32.mrf.mxu0
        %v415 = vadd.f32 %v200, %v414
        %416 = vmatmul.f32.gmra.mxu0 %v223
        %v417 = vpop.f32.mrf.mxu0
        %v418 = vadd.f32 %v200, %v417
        %419 = vmatmul.f32.gmra.mxu0 %v226
        %v420 = vpop.f32.mrf.mxu0
        %v421 = vadd.f32 %v200, %v420
        %422 = vmatmul.f32.gmra.mxu0 %v229
        %v423 = vpop.f32.mrf.mxu0
        %v424 = vadd.f32 %v200, %v423
        %425 = vmatmul.f32.gmra.mxu0 %v232
        %v426 = vpop.f32.mrf.mxu0
        %v427 = vadd.f32 %v200, %v426
        %428 = vmatmul.f32.gmra.mxu0 %v235
        %v429 = vpop.f32.mrf.mxu0
        %v430 = vadd.f32 %v200, %v429
        %431 = vmatmul.f32.gmra.mxu0 %v238
        %v432 = vpop.f32.mrf.mxu0
        %v433 = vadd.f32 %v200, %v432
        %434 = vmatmul.f32.gmra.mxu0 %v241
        %v435 = vpop.f32.mrf.mxu0
        %v436 = vadd.f32 %v200, %v435
        %437 = vmatmul.f32.gmra.mxu0 %v244
        %v438 = vpop.f32.mrf.mxu0
        %v439 = vadd.f32 %v200, %v438
        %440 = vmatmul.f32.gmra.mxu0 %v247
        %v441 = vpop.f32.mrf.mxu0
        %v442 = vadd.f32 %v200, %v441
        %443 = vmatmul.f32.gmra.mxu0 %v250
        %v444 = vpop.f32.mrf.mxu0
        %v445 = vadd.f32 %v200, %v444
        %446 = vmatmul.f32.gmra.mxu0 %v253
        %v447 = vpop.f32.mrf.mxu0
        %v448 = vadd.f32 %v200, %v447
        %449 = vdwg.mxu0
        %450 = vmatpush.msra.mxu0 0.0
        %451 = vmatpush.msra.mxu0 0.0
        %452 = vmatpush.msra.mxu0 0.0
        %453 = vmatpush.msra.mxu0 0.0
        %454 = vmatpush.msra.mxu0 0.0
        %455 = vmatpush.msra.mxu0 0.0
        %456 = vmatpush.msra.mxu0 0.0
        %457 = vmatpush.msra.mxu0 0.0
        %458 = vmatpush.msra.mxu0 0.0
        %459 = vmatpush.msra.mxu0 0.0
        %460 = vmatpush.msra.mxu0 0.0
        %461 = vmatpush.msra.mxu0 0.0
        %462 = vmatpush.msra.mxu0 0.0
        %463 = vmatpush.msra.mxu0 0.0
        %464 = vmatpush.msra.mxu0 %v195
        %465 = vmatpush.msra.mxu0 %v191
        %466 = vmatmul.f32.gmra.mxu0 %v208
        %v467 = vpop.f32.mrf.mxu0
        %v468 = vadd.f32 %v201, %v467
        %469 = vmatmul.f32.gmra.mxu0 %v211
        %v470 = vpop.f32.mrf.mxu0
        %v471 = vadd.f32 %v201, %v470
        %472 = vmatmul.f32.gmra.mxu0 %v214
        %v473 = vpop.f32.mrf.mxu0
        %v474 = vadd.f32 %v201, %v473
        %475 = vmatmul.f32.gmra.mxu0 %v217
        %v476 = vpop.f32.mrf.mxu0
        %v477 = vadd.f32 %v201, %v476
        %478 = vmatmul.f32.gmra.mxu0 %v220
        %v479 = vpop.f32.mrf.mxu0
        %v480 = vadd.f32 %v201, %v479
        %481 = vmatmul.f32.gmra.mxu0 %v223
        %v482 = vpop.f32.mrf.mxu0
        %v483 = vadd.f32 %v201, %v482
        %484 = vmatmul.f32.gmra.mxu0 %v226
        %v485 = vpop.f32.mrf.mxu0
        %v486 = vadd.f32 %v201, %v485
        %487 = vmatmul.f32.gmra.mxu0 %v229
        %v488 = vpop.f32.mrf.mxu0
        %v489 = vadd.f32 %v201, %v488
        %490 = vmatmul.f32.gmra.mxu0 %v232
        %v491 = vpop.f32.mrf.mxu0
        %v492 = vadd.f32 %v201, %v491
        %493 = vmatmul.f32.gmra.mxu0 %v235
        %v494 = vpop.f32.mrf.mxu0
        %v495 = vadd.f32 %v201, %v494
        %496 = vmatmul.f32.gmra.mxu0 %v238
        %v497 = vpop.f32.mrf.mxu0
        %v498 = vadd.f32 %v201, %v497
        %499 = vmatmul.f32.gmra.mxu0 %v241
        %v500 = vpop.f32.mrf.mxu0
        %v501 = vadd.f32 %v201, %v500
        %502 = vmatmul.f32.gmra.mxu0 %v244
        %v503 = vpop.f32.mrf.mxu0
        %v504 = vadd.f32 %v201, %v503
        %505 = vmatmul.f32.gmra.mxu0 %v247
        %v506 = vpop.f32.mrf.mxu0
        %v507 = vadd.f32 %v201, %v506
        %508 = vmatmul.f32.gmra.mxu0 %v250
        %v509 = vpop.f32.mrf.mxu0
        %v510 = vadd.f32 %v201, %v509
        %511 = vmatmul.f32.gmra.mxu0 %v253
        %v512 = vpop.f32.mrf.mxu0
        %v513 = vadd.f32 %v201, %v512
        %514 = vdwg.mxu0
        %515 = vst [vmem:[%s164] sm:$0xff] %v273
        %516 = vst [vmem:[%s164 + $0x8] sm:$0xff] %v338
        %517 = vst [vmem:[%s164 + $0x10] sm:$0xff] %v403
        %518 = vst [vmem:[%s164 + $0x18] sm:$0xff] %v468
        %519 = vst [vmem:[%s164 + $0x20] sm:$0xff] %v276
        %520 = vst [vmem:[%s164 + $0x28] sm:$0xff] %v341
        %521 = vst [vmem:[%s164 + $0x30] sm:$0xff] %v406
        %522 = vst [vmem:[%s164 + $0x38] sm:$0xff] %v471
        %523 = vst [vmem:[%s164 + $0x40] sm:$0xff] %v279
        %524 = vst [vmem:[%s164 + $0x48] sm:$0xff] %v344
        %525 = vst [vmem:[%s164 + $0x50] sm:$0xff] %v409
        %526 = vst [vmem:[%s164 + $0x58] sm:$0xff] %v474
        %527 = vst [vmem:[%s164 + $0x60] sm:$0xff] %v282
        %528 = vst [vmem:[%s164 + $0x68] sm:$0xff] %v347
        %529 = vst [vmem:[%s164 + $0x70] sm:$0xff] %v412
        %530 = vst [vmem:[%s164 + $0x78] sm:$0xff] %v477
        %531 = vst [vmem:[%s164 + $0x80] sm:$0xff] %v285
        %532 = vst [vmem:[%s164 + $0x88] sm:$0xff] %v350
        %533 = vst [vmem:[%s164 + $0x90] sm:$0xff] %v415
        %534 = vst [vmem:[%s164 + $0x98] sm:$0xff] %v480
        %535 = vst [vmem:[%s164 + $0xa0] sm:$0xff] %v288
        %536 = vst [vmem:[%s164 + $0xa8] sm:$0xff] %v353
        %537 = vst [vmem:[%s164 + $0xb0] sm:$0xff] %v418
        %538 = vst [vmem:[%s164 + $0xb8] sm:$0xff] %v483
        %539 = vst [vmem:[%s164 + $0xc0] sm:$0xff] %v291
        %540 = vst [vmem:[%s164 + $0xc8] sm:$0xff] %v356
        %541 = vst [vmem:[%s164 + $0xd0] sm:$0xff] %v421
        %542 = vst [vmem:[%s164 + $0xd8] sm:$0xff] %v486
        %543 = vst [vmem:[%s164 + $0xe0] sm:$0xff] %v294
        %544 = vst [vmem:[%s164 + $0xe8] sm:$0xff] %v359
        %545 = vst [vmem:[%s164 + $0xf0] sm:$0xff] %v424
        %546 = vst [vmem:[%s164 + $0xf8] sm:$0xff] %v489
        %547 = vst [vmem:[%s164 + $0x100] sm:$0xff] %v297
        %548 = vst [vmem:[%s164 + $0x108] sm:$0xff] %v362
        %549 = vst [vmem:[%s164 + $0x110] sm:$0xff] %v427
        %550 = vst [vmem:[%s164 + $0x118] sm:$0xff] %v492
        %551 = vst [vmem:[%s164 + $0x120] sm:$0xff] %v300
        %552 = vst [vmem:[%s164 + $0x128] sm:$0xff] %v365
        %553 = vst [vmem:[%s164 + $0x130] sm:$0xff] %v430
        %554 = vst [vmem:[%s164 + $0x138] sm:$0xff] %v495
        %555 = vst [vmem:[%s164 + $0x140] sm:$0xff] %v303
        %556 = vst [vmem:[%s164 + $0x148] sm:$0xff] %v368
        %557 = vst [vmem:[%s164 + $0x150] sm:$0xff] %v433
        %558 = vst [vmem:[%s164 + $0x158] sm:$0xff] %v498
        %559 = vst [vmem:[%s164 + $0x160] sm:$0xff] %v306
        %560 = vst [vmem:[%s164 + $0x168] sm:$0xff] %v371
        %561 = vst [vmem:[%s164 + $0x170] sm:$0xff] %v436
        %562 = vst [vmem:[%s164 + $0x178] sm:$0xff] %v501
        %563 = vst [vmem:[%s164 + $0x180] sm:$0xff] %v309
        %564 = vst [vmem:[%s164 + $0x188] sm:$0xff] %v374
        %565 = vst [vmem:[%s164 + $0x190] sm:$0xff] %v439
        %566 = vst [vmem:[%s164 + $0x198] sm:$0xff] %v504
        %567 = vst [vmem:[%s164 + $0x1a0] sm:$0xff] %v312
        %568 = vst [vmem:[%s164 + $0x1a8] sm:$0xff] %v377
        %569 = vst [vmem:[%s164 + $0x1b0] sm:$0xff] %v442
        %570 = vst [vmem:[%s164 + $0x1b8] sm:$0xff] %v507
        %571 = vst [vmem:[%s164 + $0x1c0] sm:$0xff] %v315
        %572 = vst [vmem:[%s164 + $0x1c8] sm:$0xff] %v380
        %573 = vst [vmem:[%s164 + $0x1d0] sm:$0xff] %v445
        %574 = vst [vmem:[%s164 + $0x1d8] sm:$0xff] %v510
        %575 = vst [vmem:[%s164 + $0x1e0] sm:$0xff] %v318
        %576 = vst [vmem:[%s164 + $0x1e8] sm:$0xff] %v383
        %577 = vst [vmem:[%s164 + $0x1f0] sm:$0xff] %v448
        %578 = vst [vmem:[%s164 + $0x1f8] sm:$0xff] %v513
        %s579 = sand.u32 %s93, 1
        %s580 = scalar_lea.sflag [#allocation3], %s579
        %s581 = sand.u32 %s93, 1
        %s582 = smul.addr %s581, 512
        %s583 = scalar_lea.vmem [#allocation2], %s582
        // Predicated region
        $region33: #{tpu_custom_call.1} parent=31 // pred_check
          %p584 = pneg %p103
        $region34: #{tpu_custom_call.1} parent=31 // pred_check_branch
          %586 = sbr.rel (%p584) target = $region36
        $region35: #{tpu_custom_call.1} parent=31 // pred_region
          %s587 = smul.u32 16, %s17
          %589 = vsyncadd %s580, 0
          %s590 = smul.addr %s587, 4
          %s591 = smul.addr %s590, 8
          %s592 = scalar_lea.hbm %s3, %s591
          %s593 = sshll.u32 %s583, 4
          %s594 = int_to_ptr.vmem [resolvable:$true] %s593
          %s595 = sshll.u32 %s592, 4
          %s596 = int_to_ptr.hbm [resolvable:$true] %s595
          %601 = dma.vmem_to_hbm [thread:$0]  %s594, 8192, %s596, %s580, 512, 512, 32
        $region36: #{tpu_custom_call.1} parent=31 // pred_fallthru
          _
      $region32: #{tpu_custom_call.1} parent=5 // pred_fallthru
        _
      %p602 = scmp.le.s32.totalorder 2, %s12
      // Predicated region
      $region37: #{tpu_custom_call.1} parent=5 // pred_check
        %p603 = pneg %p602
      $region38: #{tpu_custom_call.1} parent=5 // pred_check_branch
        %605 = sbr.rel (%p603) target = $region40
      $region39: #{tpu_custom_call.1} parent=5 // pred_region
        %s606 = ssub.s32 %s12, 2
        // Predicated region
        $region41: #{tpu_custom_call.1} parent=39 // pred_check
          %p607 = pneg %p109
        $region42: #{tpu_custom_call.1} parent=39 // pred_check_branch
          %609 = sbr.rel (%p607) target = $region44
        $region43: #{tpu_custom_call.1} parent=39 // pred_region
          %s610 = sand.u32 %s94, 1
          %s611 = scalar_lea.sflag [#allocation3], %s610
          %s612 = sand.u32 %s94, 1
          %s613 = smul.addr %s612, 512
          %s614 = scalar_lea.vmem [#allocation2], %s613
          %616 = dma.done %s611, 8192
        $region44: #{tpu_custom_call.1} parent=39 // pred_fallthru
          _
      $region40: #{tpu_custom_call.1} parent=5 // pred_fallthru
        _
    $region6: #{tpu_custom_call.1} parent=1 // loop_footer
      %s16 = sadd.s32 1, %s12
    $region7: #{tpu_custom_call.1} parent=1 // loop_footer_branch
      %11 = sbr.rel target = $region3
    $region8: #{tpu_custom_call.1} parent=1 // loop_exit
      _
    %617 = vsyncpa [#allocation3], 1
    %s618 = scalar_lea.sflag [#allocation3], 1
    %619 = vsyncpa %s618, 1

</llo_original>
